<compile_context>
chip_gen: v5e
topology: v5e:2x2
jax: 0.10.0
libtpu: 0.0.40
codegen_flags: <defaults>
</compile_context>

<pallas_src>
import math

import jax
import jax.numpy as jnp
from jax.experimental import pallas as pl
from jax.experimental.pallas import tpu as pltpu

_LANE_TILE = 2048               # lane-dim tile (multiple of 128 -> unmasked vst)
_ROW_TILE = 256                 # sublane-dim tile (multiple of 8)
_VMEM_LIMIT = 32 * 1024 * 1024  # explicit scoped-VMEM budget (safe on v5e/v6e/v7x)


def _round_up(x, m):
    return ((x + m - 1) // m) * m


# --------------------------------------------------------------------------
# Kernels
# --------------------------------------------------------------------------
def _bias_add_kernel(x_ref, b_ref, o_ref):
    # x_ref: (tr, tc), b_ref: (tr, 1) -> broadcast over the lane dimension.
    o_ref[...] = x_ref[...] + b_ref[...]


def _eltwise_add_kernel(a_ref, b_ref, o_ref):
    o_ref[...] = a_ref[...] + b_ref[...]


# --------------------------------------------------------------------------
# Pallas wrappers
# --------------------------------------------------------------------------
def _bias_add_pallas(x, bias):
    """x: (rows, cols); bias: (rows,) broadcast across cols."""
    rows, cols = x.shape
    dtype = x.dtype
    itemsize = jnp.dtype(dtype).itemsize

    tc = min(_LANE_TILE, _round_up(cols, 128))
    tr = min(_ROW_TILE, _round_up(rows, 8))
    rows_p = _round_up(rows, tr)
    cols_p = _round_up(cols, tc)

    if (rows_p, cols_p) != (rows, cols):
        x = jnp.pad(x, ((0, rows_p - rows), (0, cols_p - cols)))
    if rows_p != rows:
        bias = jnp.pad(bias, (0, rows_p - rows))
    b2 = bias.reshape(rows_p, 1)

    grid = (rows_p // tr, cols_p // tc)
    n = rows_p * cols_p

    out = pl.pallas_call(
        _bias_add_kernel,
        out_shape=jax.ShapeDtypeStruct((rows_p, cols_p), dtype),
        grid=grid,
        in_specs=[
            pl.BlockSpec((tr, tc), lambda i, j: (i, j)),
            pl.BlockSpec((tr, 1), lambda i, j: (i, 0)),
        ],
        out_specs=pl.BlockSpec((tr, tc), lambda i, j: (i, j)),
        compiler_params=pltpu.CompilerParams(
            dimension_semantics=("parallel", "parallel"),
            vmem_limit_bytes=_VMEM_LIMIT,
        ),
        cost_estimate=pl.CostEstimate(
            flops=n,
            transcendentals=0,
            bytes_accessed=(2 * n + rows_p) * itemsize,
        ),
    )(x, b2)

    if (rows_p, cols_p) != (rows, cols):
        out = out[:rows, :cols]
    return out


def _eltwise_add_pallas(a, b):
    """a, b: identical shapes; flattened + re-tiled lane-dense."""
    orig_shape = a.shape
    dtype = a.dtype
    itemsize = jnp.dtype(dtype).itemsize
    n = a.size

    cols = min(_LANE_TILE, _round_up(n, 128))
    rows = pl.cdiv(n, cols)
    tr = min(_ROW_TILE, _round_up(rows, 8))
    rows_p = _round_up(rows, tr)
    n_p = rows_p * cols

    a = a.reshape(-1)
    b = b.reshape(-1)
    if n_p != n:
        a = jnp.pad(a, (0, n_p - n))
        b = jnp.pad(b, (0, n_p - n))
    a2 = a.reshape(rows_p, cols)
    b2 = b.reshape(rows_p, cols)

    out = pl.pallas_call(
        _eltwise_add_kernel,
        out_shape=jax.ShapeDtypeStruct((rows_p, cols), dtype),
        grid=(rows_p // tr,),
        in_specs=[
            pl.BlockSpec((tr, cols), lambda i: (i, 0)),
            pl.BlockSpec((tr, cols), lambda i: (i, 0)),
        ],
        out_specs=pl.BlockSpec((tr, cols), lambda i: (i, 0)),
        compiler_params=pltpu.CompilerParams(
            dimension_semantics=("parallel",),
            vmem_limit_bytes=_VMEM_LIMIT,
        ),
        cost_estimate=pl.CostEstimate(
            flops=n_p,
            transcendentals=0,
            bytes_accessed=3 * n_p * itemsize,
        ),
    )(a2, b2)

    return out.reshape(-1)[:n].reshape(orig_shape)


# --------------------------------------------------------------------------
# Module forward
# --------------------------------------------------------------------------
def _leading_bias_rows(x1_shape, x2_shape):
    """Return k such that x2_shape == x1_shape[:k] + (1,)*(nd-k), else None."""
    if len(x1_shape) != len(x2_shape):
        return None
    nd = len(x1_shape)
    k = nd
    while k > 0 and x2_shape[k - 1] == 1:
        k -= 1
    if k == nd:
        return None  # no trailing singleton dims -> not a per-row bias
    if tuple(x2_shape[:k]) != tuple(x1_shape[:k]):
        return None
    return k


def fusion_add(x1, x2, x2_mask=None, x2_proj=None, *, min_pallas_bytes=(1 << 20)):
    """Pallas implementation of FusionAdd.forward (x2_mask is unused, as in the ref)."""
    x1 = jnp.asarray(x1)
    x2 = jnp.asarray(x2)

    # Match the PyTorch reference: project + unsqueeze only when BOTH shape and
    # rank differ (Fusion.tile_x2).
    if x1.shape != x2.shape and x1.ndim != x2.ndim:
        # TODO(synk): x2_proj is an arbitrary nn.Module in the reference; here
        # it is accepted as an optional JAX callable and applied as-is.
        if x2_proj is not None:
            x2 = jnp.asarray(x2_proj(x2))
        x2 = x2[..., None, None]

    out_dtype = jnp.result_type(x1.dtype, x2.dtype)
    x1 = x1.astype(out_dtype)
    x2 = x2.astype(out_dtype)

    # Tiny problems: plain fused XLA add beats pallas_call dispatch overhead.
    if x1.size * jnp.dtype(out_dtype).itemsize < min_pallas_bytes:
        return x1 + x2

    if x1.shape == x2.shape:
        return _eltwise_add_pallas(x1, x2)

    k = _leading_bias_rows(x1.shape, x2.shape)
    if k is not None:
        rows = math.prod(x1.shape[:k]) if k > 0 else 1
        cols = math.prod(x1.shape[k:])
        out = _bias_add_pallas(x1.reshape(rows, cols), x2.reshape(rows))
        return out.reshape(x1.shape)

    # General broadcast pattern not expressible as a per-row bias: plain JAX.
    return x1 + x2


# --------------------------------------------------------------------------
# Self-test
# --------------------------------------------------------------------------
if __name__ == "__main__":
    key = jax.random.PRNGKey(0)
    k1, k2, k3, k4 = jax.random.split(key, 4)

    # Small shapes consistent with the module (NCHW activations + (B, C) features).
    B, C, H, W = 2, 4, 16, 16
    x1 = jax.random.normal(k1, (B, C, H, W), dtype=jnp.float32)
    x2 = jax.random.normal(k2, (B, C), dtype=jnp.float32)
    ref = x1 + x2[:, :, None, None]

    # 1) Broadcast (unsqueeze) path through the Pallas bias kernel.
    out = fusion_add(x1, x2, min_pallas_bytes=0)
    jax.block_until_ready(out)
    assert out.shape == x1.shape
    assert jnp.allclose(out, ref, atol=1e-6, rtol=1e-6)

    # 2) Same-rank (B, C, 1, 1) x2: must NOT hit the unsqueeze branch, still correct.
    out_b = fusion_add(x1, x2[:, :, None, None], min_pallas_bytes=0)
    jax.block_until_ready(out_b)
    assert jnp.allclose(out_b, ref, atol=1e-6, rtol=1e-6)

    # 3) Same-shape elementwise path.
    x2_full = jax.random.normal(k3, (B, C, H, W), dtype=jnp.float32)
    out2 = fusion_add(x1, x2_full, min_pallas_bytes=0)
    jax.block_until_ready(out2)
    assert jnp.allclose(out2, x1 + x2_full, atol=1e-6, rtol=1e-6)

    # 4) Non-128-aligned spatial dims (H*W = 49) exercise padding / remainder path.
    B2, C2, H2, W2 = 3, 5, 7, 7
    y1 = jax.random.normal(k4, (B2, C2, H2, W2), dtype=jnp.float32)
    y2 = jax.random.normal(k2, (B2, C2), dtype=jnp.float32)
    out3 = fusion_add(y1, y2, min_pallas_bytes=0)
    jax.block_until_ready(out3)
    assert jnp.allclose(out3, y1 + y2[:, :, None, None], atol=1e-6, rtol=1e-6)

    # 5) x2_proj callable applied only inside the unsqueeze branch (as in the ref).
    out5 = fusion_add(x1, x2, x2_proj=lambda t: 2.0 * t, min_pallas_bytes=0)
    jax.block_until_ready(out5)
    assert jnp.allclose(out5, x1 + 2.0 * x2[:, :, None, None], atol=1e-6, rtol=1e-6)

    # 6) Default threshold: tiny inputs take the plain-JAX fast path.
    out6 = fusion_add(x1, x2)
    jax.block_until_ready(out6)
    assert jnp.allclose(out6, ref, atol=1e-6, rtol=1e-6)

    print("KERNEL_OK")
</pallas_src>

<mosaic_0001>
module attributes {stable_mosaic.version = 11 : i64} {
  func.func @_bias_add_kernel(%arg0: i32, %arg1: i32, %arg2: memref<8x256xf32, #tpu.memory_space<vmem>>, %arg3: memref<8x1xf32, #tpu.memory_space<vmem>>, %arg4: memref<8x256xf32, #tpu.memory_space<vmem>>) attributes {dimension_semantics = [#tpu.dimension_semantics<parallel>, #tpu.dimension_semantics<parallel>], iteration_bounds = array<i64: 1, 1>, scalar_prefetch = 0 : i64, scratch_operands = 0 : i64, tpu.core_type = #tpu.core_type<tc>, window_params = [{transform_indices = @transform_0, window_bounds = array<i64: 8, 256>}, {transform_indices = @transform_1, window_bounds = array<i64: 8, 1>}, {transform_indices = @transform_2, window_bounds = array<i64: 8, 256>}]} {
    %c0 = arith.constant 0 : index
    %c0_0 = arith.constant 0 : index
    %0 = vector.load %arg2[%c0, %c0_0] : memref<8x256xf32, #tpu.memory_space<vmem>>, vector<8x256xf32>
    %c0_1 = arith.constant 0 : index
    %c0_2 = arith.constant 0 : index
    %1 = vector.load %arg3[%c0_1, %c0_2] : memref<8x1xf32, #tpu.memory_space<vmem>>, vector<8x1xf32>
    %2 = vector.broadcast %1 : vector<8x1xf32> to vector<8x256xf32>
    %3 = arith.addf %0, %2 : vector<8x256xf32>
    %c0_3 = arith.constant 0 : index
    %c0_4 = arith.constant 0 : index
    %4 = vector.load %arg4[%c0_3, %c0_4] : memref<8x256xf32, #tpu.memory_space<vmem>>, vector<8x256xf32>
    tpu.vector_store %arg4[%c0_3, %c0_4], %3 {strides = array<i32>} : memref<8x256xf32, #tpu.memory_space<vmem>>, vector<8x256xf32>,
    return
  }
  func.func @transform_0(%arg0: i32, %arg1: i32) -> (i32, i32) {
    %c0_i32 = arith.constant 0 : i32
    return %arg0, %arg1 : i32, i32
  }
  func.func @transform_1(%arg0: i32, %arg1: i32) -> (i32, i32) {
    %c0_i32 = arith.constant 0 : i32
    %c0_i32_0 = arith.constant 0 : i32
    return %arg0, %c0_i32 : i32, i32
  }
  func.func @transform_2(%arg0: i32, %arg1: i32) -> (i32, i32) {
    %c0_i32 = arith.constant 0 : i32
    return %arg0, %arg1 : i32, i32
  }
}

</mosaic_0001>

<llo_original>
// kernel: tpu_custom_call.1
$region0: #{tpu_custom_call.1}
  #allocation0 [shape = 'u32[]', space=smem, size = 0x4, offset = 0x4, fixed_abs, tag = 'smem constant byte address 0x4 - core index']
  #allocation1 [shape = 'u32[72,128]{1,0:T(1,128)}', space=vmem, size = 0x9000, scoped, tag = 'internal scratch']
  %s0 = inlined_call_operand.hbm [shape: f32[8,256], index: 0, kind: input, shape index: {}]
  %s1 = inlined_call_operand.vmem [shape: f32[8,1], index: 1, kind: input, shape index: {}]
  %s2 = inlined_call_operand.hbm [shape: f32[8,256], index: 2, kind: output, shape index: {}]
  %s3 = sld [smem:[#allocation0]]
  $region22: #{tpu_custom_call.1} parent=0
    _
  %s5 = ssub.s32 1, %s3
  %s6 = scalar_select 0, %s5, %s3
  $region1: #{tpu_custom_call.1} parent=0
    #allocation2 [shape = 'u8[8192]{0}', space=vmem, size = 0x2000, scoped, tag = 'input window, operand 0, single buffered']
    #allocation3 [shape = 's32[1]{0}', space=sflag, size = 0x4, scoped, tag = 'scoped memory for tpu_custom_call.1']
    #allocation4 [shape = 's32[1]{0}', space=sflag, size = 0x4, scoped, tag = 'scoped memory for tpu_custom_call.1']
    #allocation5 [shape = 'u8[8192]{0}', space=vmem, size = 0x2000, scoped, tag = 'output window, operand 0, single buffered']
    %7 = vsyncpa [#allocation3], 0
    %8 = vsyncpa [#allocation4], 0
    // Predicated region
    $region2: #{tpu_custom_call.1} parent=1 // pred_check
      _
    $region3: #{tpu_custom_call.1} parent=1 // pred_check_branch
      %10 = sbr.rel (0) target = $region5
    $region4: #{tpu_custom_call.1} parent=1 // pred_region
      %12 = vsyncadd [#allocation3], 0
      %s14 = sshll.u32 %s0, 4
      %s15 = int_to_ptr.hbm [resolvable:$true] %s14
      %s16 = sshll.u32 [#allocation2], 4
      %s17 = int_to_ptr.vmem [resolvable:$true] %s16
      %19 = dma.hbm_to_vmem [thread:$0]  %s15, 256, %s17, [#allocation3]
    $region5: #{tpu_custom_call.1} parent=1 // pred_fallthru
      _
    // Predicated region
    $region6: #{tpu_custom_call.1} parent=1 // pred_check
      _
    $region7: #{tpu_custom_call.1} parent=1 // pred_check_branch
      %21 = sbr.rel (0) target = $region9
    $region8: #{tpu_custom_call.1} parent=1 // pred_region
      _
    $region9: #{tpu_custom_call.1} parent=1 // pred_fallthru
      _
    // Predicated region
    $region10: #{tpu_custom_call.1} parent=1 // pred_check
      _
    $region11: #{tpu_custom_call.1} parent=1 // pred_check_branch
      %23 = sbr.rel (0) target = $region13
    $region12: #{tpu_custom_call.1} parent=1 // pred_region
      %25 = dma.done [#allocation3], 256
    $region13: #{tpu_custom_call.1} parent=1 // pred_fallthru
      _
    %v26 = vld [vmem:[#allocation2] sm:$0xff]
    %v27 = vld [vmem:[#allocation2 + $0x8] sm:$0xff]
    %v28 = vld [vmem:[%s1] sm:$0xff]
    %30 = vset.pattern.permute.xlu0 0
    %31 = vperm.xlu0 %30, %v28
    %v32 = vpop.permute.xlu0 %31
    %v34 = vadd.f32 %v26, %v32
    %v35 = vadd.f32 %v27, %v32
    %36 = vst [vmem:[#allocation5] sm:$0xff] %v34
    %37 = vst [vmem:[#allocation5 + $0x8] sm:$0xff] %v35
    // Predicated region
    $region14: #{tpu_custom_call.1} parent=1 // pred_check
      _
    $region15: #{tpu_custom_call.1} parent=1 // pred_check_branch
      %39 = sbr.rel (0) target = $region17
    $region16: #{tpu_custom_call.1} parent=1 // pred_region
      %41 = vsyncadd [#allocation4], 0
      %s43 = sshll.u32 [#allocation5], 4
      %s44 = int_to_ptr.vmem [resolvable:$true] %s43
      %s45 = sshll.u32 %s2, 4
      %s46 = int_to_ptr.hbm [resolvable:$true] %s45
      %48 = dma.vmem_to_hbm [thread:$0]  %s44, 256, %s46, [#allocation4]
    $region17: #{tpu_custom_call.1} parent=1 // pred_fallthru
      _
    // Predicated region
    $region18: #{tpu_custom_call.1} parent=1 // pred_check
      _
    $region19: #{tpu_custom_call.1} parent=1 // pred_check_branch
      %50 = sbr.rel (0) target = $region21
    $region20: #{tpu_custom_call.1} parent=1 // pred_region
      %52 = dma.done [#allocation4], 256
    $region21: #{tpu_custom_call.1} parent=1 // pred_fallthru
      _
    %53 = vsyncpa [#allocation3], 1
    %54 = vsyncpa [#allocation4], 1

</llo_original>
